<compile_context>
chip_gen: v7x
topology: tpu7x:2x2x1
jax: 0.10.0
libtpu: 0.0.40
codegen_flags: <defaults>
</compile_context>

<pallas_src>
import jax
import jax.numpy as jnp
from jax.experimental import pallas as pl
from jax.experimental.pallas import tpu as pltpu


def _mlp_kernel(x_ref, w1_ref, b1_ref, w2_ref, b2_ref, o_ref):
    # x_ref:  (Cin,  TS)   spatial tile, lane-dense
    # w1_ref: (Cmid, Cin)  resident
    # b1_ref: (Cmid, 1)
    # w2_ref: (Cout, Cmid) resident
    # b2_ref: (Cout, 1)
    # o_ref:  (Cout, TS)
    x = x_ref[...]
    h = jnp.dot(w1_ref[...], x, preferred_element_type=jnp.float32)      # (Cmid, TS)
    h = jnp.maximum(h + b1_ref[...], 0.0)
    y = jnp.dot(w2_ref[...], h, preferred_element_type=jnp.float32)      # (Cout, TS)
    o_ref[...] = jnp.maximum(y + b2_ref[...], 0.0).astype(o_ref.dtype)


def mlp_pallas(x_nchw, w1, b1, w2, b2, *, ts_cap=8192):
    """MLP forward: ReLU(conv1x1(ReLU(conv1x1(x, w1, b1)), w2, b2)).

    x_nchw: (N, Cin, H, W)
    w1: (Cmid, Cin, 1, 1), b1: (Cmid,)     (PyTorch Conv2d layout)
    w2: (Cout, Cmid, 1, 1), b2: (Cout,)
    returns (N, Cout, H, W)
    """
    N, Cin, H, W = x_nchw.shape
    Cmid = w1.shape[0]
    Cout = w2.shape[0]
    HW = H * W

    # Free reshape to (N, Cin, H*W): spatial axis is last (lane) dim.
    x3 = x_nchw.reshape(N, Cin, HW)
    w1m = w1.reshape(Cmid, Cin)
    w2m = w2.reshape(Cout, Cmid)
    b1m = b1.reshape(Cmid, 1)
    b2m = b2.reshape(Cout, 1)

    # Pick the spatial tile: as large as a conservative VMEM budget allows
    # (double-buffered x + out + mid stay well under the scoped VMEM limit on
    # every generation, including v7x's 64 MiB physical VMEM), multiple of 128.
    bytes_per_lane = 4 * 2 * (Cin + Cmid + Cout)          # f32, double-buffered
    budget = 16 * 1024 * 1024
    cap = max(128, (budget // bytes_per_lane) // 128 * 128)
    cap = min(cap, ts_cap)
    hw_rounded = pl.cdiv(HW, 128) * 128
    TS = min(cap, hw_rounded)

    # Pad spatial axis so TS divides it; padded columns are sliced off at the end.
    HW_pad = pl.cdiv(HW, TS) * TS
    if HW_pad != HW:
        x3 = jnp.pad(x3, ((0, 0), (0, 0), (0, HW_pad - HW)))

    grid = (N, HW_pad // TS)

    out3 = pl.pallas_call(
        _mlp_kernel,
        out_shape=jax.ShapeDtypeStruct((N, Cout, HW_pad), x_nchw.dtype),
        grid_spec=pltpu.PrefetchScalarGridSpec(
            num_scalar_prefetch=0,
            grid=grid,
            in_specs=[
                # x tile: batch dim squeezed, (Cin, TS) lane-dense slab
                pl.BlockSpec((None, Cin, TS), lambda n, s: (n, 0, s)),
                # weights / biases: tiny, constant index_map -> stay resident
                pl.BlockSpec((Cmid, Cin), lambda n, s: (0, 0)),
                pl.BlockSpec((Cmid, 1), lambda n, s: (0, 0)),
                pl.BlockSpec((Cout, Cmid), lambda n, s: (0, 0)),
                pl.BlockSpec((Cout, 1), lambda n, s: (0, 0)),
            ],
            out_specs=pl.BlockSpec((None, Cout, TS), lambda n, s: (n, 0, s)),
        ),
        compiler_params=pltpu.CompilerParams(
            dimension_semantics=("parallel", "parallel")),
    )(x3, w1m, b1m, w2m, b2m)

    # Drop spatial padding and reshape (free) back to NCHW.
    return out3[:, :, :HW].reshape(N, Cout, H, W)


if __name__ == "__main__":
    # Small shapes consistent with the module: N=2, in=4, H=W=16,
    # mid_channels=None -> mid=out=8.
    N, Cin, H, W = 2, 4, 16, 16
    Cmid, Cout = 8, 8

    key = jax.random.PRNGKey(0)
    kx, kw1, kb1, kw2, kb2 = jax.random.split(key, 5)

    x = jax.random.normal(kx, (N, Cin, H, W), dtype=jnp.float32)

    # Deterministic param init mimicking PyTorch Conv2d defaults
    # (uniform with bound = 1/sqrt(fan_in), fan_in = C_in * 1 * 1).
    bound1 = 1.0 / jnp.sqrt(jnp.float32(Cin))
    w1 = jax.random.uniform(kw1, (Cmid, Cin, 1, 1),
                            minval=-bound1, maxval=bound1, dtype=jnp.float32)
    b1 = jax.random.uniform(kb1, (Cmid,),
                            minval=-bound1, maxval=bound1, dtype=jnp.float32)
    bound2 = 1.0 / jnp.sqrt(jnp.float32(Cmid))
    w2 = jax.random.uniform(kw2, (Cout, Cmid, 1, 1),
                            minval=-bound2, maxval=bound2, dtype=jnp.float32)
    b2 = jax.random.uniform(kb2, (Cout,),
                            minval=-bound2, maxval=bound2, dtype=jnp.float32)

    out = mlp_pallas(x, w1, b1, w2, b2)
    out = jax.block_until_ready(out)

    # Plain-JAX reference of the double conv1x1 + ReLU forward.
    h_ref = jnp.einsum("nchw,mc->nmhw", x, w1.reshape(Cmid, Cin)) \
        + b1[None, :, None, None]
    h_ref = jnp.maximum(h_ref, 0.0)
    ref = jnp.einsum("nmhw,om->nohw", h_ref, w2.reshape(Cout, Cmid)) \
        + b2[None, :, None, None]
    ref = jnp.maximum(ref, 0.0)

    assert out.shape == (N, Cout, H, W)
    assert jnp.allclose(out, ref, atol=1e-4, rtol=1e-4)

    print("KERNEL_OK")
</pallas_src>

<mosaic_0001>
module attributes {stable_mosaic.version = 11 : i64} {
  func.func @_mlp_kernel(%arg0: i32, %arg1: i32, %arg2: memref<1x4x256xf32, #tpu.memory_space<vmem>>, %arg3: memref<8x4xf32, #tpu.memory_space<vmem>>, %arg4: memref<8x1xf32, #tpu.memory_space<vmem>>, %arg5: memref<8x8xf32, #tpu.memory_space<vmem>>, %arg6: memref<8x1xf32, #tpu.memory_space<vmem>>, %arg7: memref<1x8x256xf32, #tpu.memory_space<vmem>>) attributes {dimension_semantics = [#tpu.dimension_semantics<parallel>, #tpu.dimension_semantics<parallel>], iteration_bounds = array<i64: 2, 1>, scalar_prefetch = 0 : i64, scratch_operands = 0 : i64, tpu.core_type = #tpu.core_type<tc>, window_params = [{transform_indices = @transform_0, window_bounds = array<i64: 1, 4, 256>}, {pipeline_mode = #tpu.pipeline_mode<synchronous>, transform_indices = @transform_1, window_bounds = array<i64: 8, 4>}, {pipeline_mode = #tpu.pipeline_mode<synchronous>, transform_indices = @transform_2, window_bounds = array<i64: 8, 1>}, {pipeline_mode = #tpu.pipeline_mode<synchronous>, transform_indices = @transform_3, window_bounds = array<i64: 8, 8>}, {pipeline_mode = #tpu.pipeline_mode<synchronous>, transform_indices = @transform_4, window_bounds = array<i64: 8, 1>}, {transform_indices = @transform_5, window_bounds = array<i64: 1, 8, 256>}]} {
    %c0 = arith.constant 0 : index
    %c0_0 = arith.constant 0 : index
    %c0_1 = arith.constant 0 : index
    %0 = vector.load %arg2[%c0, %c0_0, %c0_1] : memref<1x4x256xf32, #tpu.memory_space<vmem>>, vector<1x4x256xf32>
    %1 = vector.shape_cast %0 : vector<1x4x256xf32> to vector<4x256xf32>
    %c0_2 = arith.constant 0 : index
    %c0_3 = arith.constant 0 : index
    %2 = vector.load %arg3[%c0_2, %c0_3] : memref<8x4xf32, #tpu.memory_space<vmem>>, vector<8x4xf32>
    %cst = arith.constant dense<0.000000e+00> : vector<8x256xf32>
    %3 = tpu.matmul %2, %1, %cst {dimension_numbers = #tpu.dot_dimension_numbers<[1], [0], [0], [1], [0, 0, 1, 1], [], []>} : vector<8x4xf32>, vector<4x256xf32>, vector<8x256xf32> -> vector<8x256xf32>
    %c0_4 = arith.constant 0 : index
    %c0_5 = arith.constant 0 : index
    %4 = vector.load %arg4[%c0_4, %c0_5] : memref<8x1xf32, #tpu.memory_space<vmem>>, vector<8x1xf32>
    %5 = vector.broadcast %4 : vector<8x1xf32> to vector<8x256xf32>
    %6 = arith.addf %3, %5 : vector<8x256xf32>
    %cst_6 = arith.constant 0.000000e+00 : f32
    %7 = vector.broadcast %cst_6 : f32 to vector<8x256xf32>
    %8 = arith.maximumf %6, %7 : vector<8x256xf32>
    %c0_7 = arith.constant 0 : index
    %c0_8 = arith.constant 0 : index
    %9 = vector.load %arg5[%c0_7, %c0_8] : memref<8x8xf32, #tpu.memory_space<vmem>>, vector<8x8xf32>
    %cst_9 = arith.constant dense<0.000000e+00> : vector<8x256xf32>
    %10 = tpu.matmul %9, %8, %cst_9 {dimension_numbers = #tpu.dot_dimension_numbers<[1], [0], [0], [1], [0, 0, 1, 1], [], []>} : vector<8x8xf32>, vector<8x256xf32>, vector<8x256xf32> -> vector<8x256xf32>
    %c0_10 = arith.constant 0 : index
    %c0_11 = arith.constant 0 : index
    %11 = vector.load %arg6[%c0_10, %c0_11] : memref<8x1xf32, #tpu.memory_space<vmem>>, vector<8x1xf32>
    %12 = vector.broadcast %11 : vector<8x1xf32> to vector<8x256xf32>
    %13 = arith.addf %10, %12 : vector<8x256xf32>
    %cst_12 = arith.constant 0.000000e+00 : f32
    %14 = vector.broadcast %cst_12 : f32 to vector<8x256xf32>
    %15 = arith.maximumf %13, %14 : vector<8x256xf32>
    %c0_13 = arith.constant 0 : index
    %c0_14 = arith.constant 0 : index
    %c0_15 = arith.constant 0 : index
    %16 = vector.load %arg7[%c0_13, %c0_14, %c0_15] : memref<1x8x256xf32, #tpu.memory_space<vmem>>, vector<1x8x256xf32>
    %17 = vector.shape_cast %16 : vector<1x8x256xf32> to vector<8x256xf32>
    %18 = vector.shape_cast %15 : vector<8x256xf32> to vector<1x8x256xf32>
    tpu.vector_store %arg7[%c0_13, %c0_14, %c0_15], %18 {strides = array<i32>} : memref<1x8x256xf32, #tpu.memory_space<vmem>>, vector<1x8x256xf32>,
    return
  }
  func.func @transform_0(%arg0: i32, %arg1: i32) -> (i32, i32, i32) {
    %c0_i32 = arith.constant 0 : i32
    %c0_i32_0 = arith.constant 0 : i32
    return %arg0, %c0_i32, %arg1 : i32, i32, i32
  }
  func.func @transform_1(%arg0: i32, %arg1: i32) -> (i32, i32) {
    %c0_i32 = arith.constant 0 : i32
    %c0_i32_0 = arith.constant 0 : i32
    %c0_i32_1 = arith.constant 0 : i32
    return %c0_i32, %c0_i32_0 : i32, i32
  }
  func.func @transform_2(%arg0: i32, %arg1: i32) -> (i32, i32) {
    %c0_i32 = arith.constant 0 : i32
    %c0_i32_0 = arith.constant 0 : i32
    %c0_i32_1 = arith.constant 0 : i32
    return %c0_i32, %c0_i32_0 : i32, i32
  }
  func.func @transform_3(%arg0: i32, %arg1: i32) -> (i32, i32) {
    %c0_i32 = arith.constant 0 : i32
    %c0_i32_0 = arith.constant 0 : i32
    %c0_i32_1 = arith.constant 0 : i32
    return %c0_i32, %c0_i32_0 : i32, i32
  }
  func.func @transform_4(%arg0: i32, %arg1: i32) -> (i32, i32) {
    %c0_i32 = arith.constant 0 : i32
    %c0_i32_0 = arith.constant 0 : i32
    %c0_i32_1 = arith.constant 0 : i32
    return %c0_i32, %c0_i32_0 : i32, i32
  }
  func.func @transform_5(%arg0: i32, %arg1: i32) -> (i32, i32, i32) {
    %c0_i32 = arith.constant 0 : i32
    %c0_i32_0 = arith.constant 0 : i32
    return %arg0, %c0_i32, %arg1 : i32, i32, i32
  }
}

</mosaic_0001>

<llo_original>
// kernel: tpu_custom_call.1
$region0: #{tpu_custom_call.1}
  #allocation0 [shape = 'u32[]', space=smem, size = 0x4, offset = 0x4, fixed_abs, tag = 'smem constant byte address 0x4 - core index']
  #allocation1 [shape = 'u32[144,128]{1,0:T(1,128)}', space=vmem, size = 0x12000, scoped, tag = 'internal scratch']
  %s0 = inlined_call_operand.vmem [shape: f32[2,4,256], index: 0, kind: input, shape index: {}]
  %s1 = inlined_call_operand.vmem [shape: f32[8,4], index: 1, kind: input, shape index: {}]
  %s2 = inlined_call_operand.vmem [shape: f32[8,1], index: 2, kind: input, shape index: {}]
  %s3 = inlined_call_operand.vmem [shape: f32[8,8], index: 3, kind: input, shape index: {}]
  %s4 = inlined_call_operand.vmem [shape: f32[8,1], index: 4, kind: input, shape index: {}]
  %s5 = inlined_call_operand.hbm [shape: f32[2,8,256], index: 5, kind: output, shape index: {}]
  %s6 = sld [smem:[#allocation0]]
  $region53: #{tpu_custom_call.1} parent=0
    _
  %s8 = ssub.s32 1, %s6
  %s9 = scalar_select 0, %s8, %s6
  $region1: #{tpu_custom_call.1} parent=0
    #allocation2 [shape = 'u8[16384]{0}', space=vmem, size = 0x4000, scoped, tag = 'output window, operand 0']
    #allocation3 [shape = 's32[2]{0}', space=sflag, size = 0x8, scoped, tag = 'scoped memory for tpu_custom_call.1']
    %10 = vsyncpa [#allocation3], 0
    %s11 = scalar_lea.sflag [#allocation3], 1
    %12 = vsyncpa %s11, 0
    loop: start=0, step=1, limit=4
    $region2: #{tpu_custom_call.1} parent=1 // loop_pre_header
      _
    $region3: #{tpu_custom_call.1} parent=1 // loop_header
      %s14 = sphi 0, %s18
      %p15 = scmp.ge.s32.totalorder %s14, 4
      %s21 = sphi 0, %s33
      %s22 = sphi 0, %s29
      %s23 = sphi 0, %s21
      %s24 = sphi 0, %s22
      %s25 = sphi 0, %s23
      %s26 = sphi 0, %s24
      %s38 = sphi 0, %s40
      %s41 = sphi 0, %s38
      %s42 = sphi 0, %s41
      %s58 = sphi 0, %s42
      %s62 = sphi 0, %s62
      %s64 = sphi 0, %s62
      %s65 = sphi 0, %s64
      %s79 = sphi 0, %s65
      %s83 = sphi 0, %s83
      %s85 = sphi 0, %s83
      %s86 = sphi 0, %s85
      %s100 = sphi 0, %s86
      %s104 = sphi 0, %s104
      %s106 = sphi 0, %s104
      %s107 = sphi 0, %s106
      %s121 = sphi 0, %s107
      %s125 = sphi 0, %s125
      %s127 = sphi 0, %s125
      %s128 = sphi 0, %s127
      %s142 = sphi 0, %s128
      %s150 = sphi 0, %s152
      %s153 = sphi 0, %s150
      %s154 = sphi 0, %s153
      %s170 = sphi 0, %s154
    $region4: #{tpu_custom_call.1} parent=1 // loop_header_branch
      %17 = sbr.rel (%p15) target = $region8
    $region5: #{tpu_custom_call.1} parent=1 // loop_body
      %s19 = ssub.s32 %s14, 1
      %s20 = ssub.s32 %s14, 2
      %s27 = sadd.s32 1, %s22
      %p28 = scmp.ge.s32.totalorder %s27, 1
      %s29 = scalar_select %p28, 0, %s27
      %s30 = sadd.s32 1, %s21
      %s31 = scalar_select %p28, %s30, %s21
      %p32 = scmp.ge.s32.totalorder %s31, 2
      %s33 = scalar_select %p32, 0, %s31
      %s34 = ssub.s32 %s21, %s33
      %s35 = ssub.s32 %s22, %s29
      %s36 = sor.u32 %s34, %s35
      %p37 = scmp.eq.s32.totalorder %s36, 0
      %s39 = sadd.s32 %s38, 1
      %s40 = scalar_select %p37, %s38, %s39
      %p43 = pneg %p37
      %p44 = scmp.eq.s32.totalorder %s14, 1
      %p45 = por %p43, %p44
      %p46 = scmp.ne.s32.totalorder %s38, %s41
      %p47 = scmp.eq.s32.totalorder %s14, 0
      %p48 = por %p46, %p47
      %p49 = scmp.ne.s32.totalorder %s38, %s41
      %p50 = scmp.eq.s32.totalorder %s19, 1
      %p51 = por %p49, %p50
      %p52 = scmp.ne.s32.totalorder %s41, %s42
      %p53 = scmp.eq.s32.totalorder %s19, 0
      %p54 = por %p52, %p53
      %p55 = scmp.ne.s32.totalorder %s41, %s42
      %p56 = scmp.eq.s32.totalorder %s20, 1
      %p57 = por %p55, %p56
      %p59 = scmp.ne.s32.totalorder %s42, %s58
      %p60 = scmp.eq.s32.totalorder %s20, 0
      %p61 = por %p59, %p60
      %s63 = sadd.s32 %s62, 1
      %p66 = scmp.eq.s32.totalorder %s14, 1
      %p67 = scmp.ne.s32.totalorder %s62, %s64
      %p68 = scmp.eq.s32.totalorder %s14, 0
      %p69 = por %p67, %p68
      %p70 = scmp.ne.s32.totalorder %s62, %s64
      %p71 = scmp.eq.s32.totalorder %s19, 1
      %p72 = por %p70, %p71
      %p73 = scmp.ne.s32.totalorder %s64, %s65
      %p74 = scmp.eq.s32.totalorder %s19, 0
      %p75 = por %p73, %p74
      %p76 = scmp.ne.s32.totalorder %s64, %s65
      %p77 = scmp.eq.s32.totalorder %s20, 1
      %p78 = por %p76, %p77
      %p80 = scmp.ne.s32.totalorder %s65, %s79
      %p81 = scmp.eq.s32.totalorder %s20, 0
      %p82 = por %p80, %p81
      %s84 = sadd.s32 %s83, 1
      %p87 = scmp.eq.s32.totalorder %s14, 1
      %p88 = scmp.ne.s32.totalorder %s83, %s85
      %p89 = scmp.eq.s32.totalorder %s14, 0
      %p90 = por %p88, %p89
      %p91 = scmp.ne.s32.totalorder %s83, %s85
      %p92 = scmp.eq.s32.totalorder %s19, 1
      %p93 = por %p91, %p92
      %p94 = scmp.ne.s32.totalorder %s85, %s86
      %p95 = scmp.eq.s32.totalorder %s19, 0
      %p96 = por %p94, %p95
      %p97 = scmp.ne.s32.totalorder %s85, %s86
      %p98 = scmp.eq.s32.totalorder %s20, 1
      %p99 = por %p97, %p98
      %p101 = scmp.ne.s32.totalorder %s86, %s100
      %p102 = scmp.eq.s32.totalorder %s20, 0
      %p103 = por %p101, %p102
      %s105 = sadd.s32 %s104, 1
      %p108 = scmp.eq.s32.totalorder %s14, 1
      %p109 = scmp.ne.s32.totalorder %s104, %s106
      %p110 = scmp.eq.s32.totalorder %s14, 0
      %p111 = por %p109, %p110
      %p112 = scmp.ne.s32.totalorder %s104, %s106
      %p113 = scmp.eq.s32.totalorder %s19, 1
      %p114 = por %p112, %p113
      %p115 = scmp.ne.s32.totalorder %s106, %s107
      %p116 = scmp.eq.s32.totalorder %s19, 0
      %p117 = por %p115, %p116
      %p118 = scmp.ne.s32.totalorder %s106, %s107
      %p119 = scmp.eq.s32.totalorder %s20, 1
      %p120 = por %p118, %p119
      %p122 = scmp.ne.s32.totalorder %s107, %s121
      %p123 = scmp.eq.s32.totalorder %s20, 0
      %p124 = por %p122, %p123
      %s126 = sadd.s32 %s125, 1
      %p129 = scmp.eq.s32.totalorder %s14, 1
      %p130 = scmp.ne.s32.totalorder %s125, %s127
      %p131 = scmp.eq.s32.totalorder %s14, 0
      %p132 = por %p130, %p131
      %p133 = scmp.ne.s32.totalorder %s125, %s127
      %p134 = scmp.eq.s32.totalorder %s19, 1
      %p135 = por %p133, %p134
      %p136 = scmp.ne.s32.totalorder %s127, %s128
      %p137 = scmp.eq.s32.totalorder %s19, 0
      %p138 = por %p136, %p137
      %p139 = scmp.ne.s32.totalorder %s127, %s128
      %p140 = scmp.eq.s32.totalorder %s20, 1
      %p141 = por %p139, %p140
      %p143 = scmp.ne.s32.totalorder %s128, %s142
      %p144 = scmp.eq.s32.totalorder %s20, 0
      %p145 = por %p143, %p144
      %s146 = ssub.s32 %s21, %s33
      %s147 = ssub.s32 %s22, %s29
      %s148 = sor.u32 %s146, %s147
      %p149 = scmp.eq.s32.totalorder %s148, 0
      %s151 = sadd.s32 %s150, 1
      %s152 = scalar_select %p149, %s150, %s151
      %p155 = pneg %p149
      %p156 = scmp.eq.s32.totalorder %s14, 1
      %p157 = por %p155, %p156
      %p158 = scmp.ne.s32.totalorder %s150, %s153
      %p159 = scmp.eq.s32.totalorder %s14, 0
      %p160 = por %p158, %p159
      %p161 = scmp.ne.s32.totalorder %s150, %s153
      %p162 = scmp.eq.s32.totalorder %s19, 1
      %p163 = por %p161, %p162
      %p164 = scmp.ne.s32.totalorder %s153, %s154
      %p165 = scmp.eq.s32.totalorder %s19, 0
      %p166 = por %p164, %p165
      %p167 = scmp.ne.s32.totalorder %s153, %s154
      %p168 = scmp.eq.s32.totalorder %s20, 1
      %p169 = por %p167, %p168
      %p171 = scmp.ne.s32.totalorder %s154, %s170
      %p172 = scmp.eq.s32.totalorder %s20, 0
      %p173 = por %p171, %p172
      %p174 = scmp.le.s32.totalorder 1, %s14
      %p175 = scmp.lt.s32.totalorder %s14, 3
      %p176 = pnand %p174, %p175
      %p177 = pneg %p176
      // Predicated region
      $region9: #{tpu_custom_call.1} parent=5 // pred_check
        _
      $region10: #{tpu_custom_call.1} parent=5 // pred_check_branch
        %179 = sbr.rel (%p176) target = $region12
      $region11: #{tpu_custom_call.1} parent=5 // pred_region
        %s180 = ssub.s32 %s14, 1
        // Predicated region
        $region13: #{tpu_custom_call.1} parent=11 // pred_check
          %p181 = pneg %p75
        $region14: #{tpu_custom_call.1} parent=11 // pred_check_branch
          %183 = sbr.rel (%p181) target = $region16
        $region15: #{tpu_custom_call.1} parent=11 // pred_region
          _
        $region16: #{tpu_custom_call.1} parent=11 // pred_fallthru
          _
        // Predicated region
        $region17: #{tpu_custom_call.1} parent=11 // pred_check
          %p184 = pneg %p96
        $region18: #{tpu_custom_call.1} parent=11 // pred_check_branch
          %186 = sbr.rel (%p184) target = $region20
        $region19: #{tpu_custom_call.1} parent=11 // pred_region
          _
        $region20: #{tpu_custom_call.1} parent=11 // pred_fallthru
          _
        // Predicated region
        $region21: #{tpu_custom_call.1} parent=11 // pred_check
          %p187 = pneg %p117
        $region22: #{tpu_custom_call.1} parent=11 // pred_check_branch
          %189 = sbr.rel (%p187) target = $region24
        $region23: #{tpu_custom_call.1} parent=11 // pred_region
          _
        $region24: #{tpu_custom_call.1} parent=11 // pred_fallthru
          _
        // Predicated region
        $region25: #{tpu_custom_call.1} parent=11 // pred_check
          %p190 = pneg %p138
        $region26: #{tpu_custom_call.1} parent=11 // pred_check_branch
          %192 = sbr.rel (%p190) target = $region28
        $region27: #{tpu_custom_call.1} parent=11 // pred_region
          _
        $region28: #{tpu_custom_call.1} parent=11 // pred_fallthru
          _
      $region12: #{tpu_custom_call.1} parent=5 // pred_fallthru
        _
      %p193 = scmp.lt.s32.totalorder %s14, 2
      // Predicated region
      $region29: #{tpu_custom_call.1} parent=5 // pred_check
        %p194 = pneg %p193
      $region30: #{tpu_custom_call.1} parent=5 // pred_check_branch
        %196 = sbr.rel (%p194) target = $region32
      $region31: #{tpu_custom_call.1} parent=5 // pred_region
        // Predicated region
        $region33: #{tpu_custom_call.1} parent=31 // pred_check
          %p197 = pneg %p48
        $region34: #{tpu_custom_call.1} parent=31 // pred_check_branch
          %199 = sbr.rel (%p197) target = $region36
        $region35: #{tpu_custom_call.1} parent=31 // pred_region
          %s200 = smul.u32 2, %s22
          %p201 = scmp.lt.s32.totalorder %s21, 1
          %s202 = scalar_select %p201, %s21, 1
          %p203 = scmp.lt.s32.totalorder %s200, 1
          %s204 = scalar_select %p203, %s200, 1
          %s205 = smul.addr %s202, 2
          %s206 = sadd.s32 %s204, %s205
          %s207 = smul.addr %s206, 4
          %s208 = scalar_lea.vmem %s0, %s207
          %s209 = smul.u32 2, %s22
        $region36: #{tpu_custom_call.1} parent=31 // pred_fallthru
          _
      $region32: #{tpu_custom_call.1} parent=5 // pred_fallthru
        _
      %p210 = scmp.le.s32.totalorder 1, %s14
      %p211 = scmp.lt.s32.totalorder %s14, 3
      %p212 = pnand %p210, %p211
      %p213 = pneg %p212
      // Predicated region
      $region37: #{tpu_custom_call.1} parent=5 // pred_check
        _
      $region38: #{tpu_custom_call.1} parent=5 // pred_check_branch
        %215 = sbr.rel (%p212) target = $region40
      $region39: #{tpu_custom_call.1} parent=5 // pred_region
        %s216 = ssub.s32 %s14, 1
        %s217 = smul.u32 2, %s24
        %p218 = scmp.lt.s32.totalorder %s23, 1
        %s219 = scalar_select %p218, %s23, 1
        %p220 = scmp.lt.s32.totalorder %s217, 1
        %s221 = scalar_select %p220, %s217, 1
        %s222 = smul.addr %s219, 2
        %s223 = sadd.s32 %s221, %s222
        %s224 = smul.addr %s223, 4
        %s225 = scalar_lea.vmem %s0, %s224
        %p226 = pneg %p54
        %p227 = pneg %p51
        %p228 = pneg %p75
        %p229 = pneg %p72
        %p230 = pneg %p96
        %p231 = pneg %p93
        %p232 = pneg %p117
        %p233 = pneg %p114
        %p234 = pneg %p138
        %p235 = pneg %p135
        %p236 = pneg %p166
        %p237 = pneg %p163
        %s238 = sand.u32 %s153, 1
        %s239 = scalar_lea.sflag [#allocation3], %s238
        %s240 = sand.u32 %s153, 1
        %s241 = smul.addr %s240, 16
        %s242 = scalar_lea.vmem [#allocation2], %s241
        %s243 = smul.u32 2, %s24
        %p244 = scmp.lt.s32.totalorder %s23, 1
        %s245 = scalar_select %p244, %s23, 1
        %p246 = scmp.lt.s32.totalorder %s243, 1
        %s247 = scalar_select %p246, %s243, 1
        %s248 = smul.addr %s245, 2
        %s249 = sadd.s32 %s247, %s248
        %s250 = smul.addr %s249, 4
        %s251 = scalar_lea.vmem %s0, %s250
        %s252 = smul.u32 2, %s24
        %s253 = smul.u32 2, %s24
        %v254 = vld [vmem:[%s251] sm:$0xff]
        %v255 = vld [vmem:[%s1] sm:$0xff]
        %v256 = vld [vmem:[%s2] sm:$0xff]
        %258 = vset.pattern.permute.xlu0 0
        %259 = vperm.xlu0 %258, %v256
        %v260 = vpop.permute.xlu0 %259
        %v263 = vcombine.high %v254, %v254
        %vm264 = vcmask 31744
        %v266 = vsel %vm264, %v255, 0
        %vm268 = vcmask 1043456
        %v269 = vsel %vm268, %v254, 0
        %v271 = vsel %vm268, %v263, 0
        %273 = vmatprep.subr.mxu0 %v271
        %274 = vmatpush1.msra.mxu0 %v269
        %275 = vmatprep.subr.mxu0 0.0
        %276 = vmatpush1.msra.mxu0 0.0
        %277 = vmatprep.subr.mxu0 0.0
        %278 = vmatpush1.msra.mxu0 0.0
        %279 = vmatprep.subr.mxu0 0.0
        %280 = vmatpush1.msra.mxu0 0.0
        %281 = vmatprep.subr.mxu0 0.0
        %282 = vmatpush1.msra.mxu0 0.0
        %283 = vmatprep.subr.mxu0 0.0
        %284 = vmatpush1.msra.mxu0 0.0
        %285 = vmatprep.subr.mxu0 0.0
        %286 = vmatpush1.msra.mxu0 0.0
        %287 = vmatprep.subr.mxu0 0.0
        %288 = vmatpush1.msra.mxu0 0.0
        %289 = vmatprep.subr.mxu0 0.0
        %290 = vmatpush1.msra.mxu0 0.0
        %291 = vmatprep.subr.mxu0 0.0
        %292 = vmatpush1.msra.mxu0 0.0
        %293 = vmatprep.subr.mxu0 0.0
        %294 = vmatpush1.msra.mxu0 0.0
        %295 = vmatprep.subr.mxu0 0.0
        %296 = vmatpush1.msra.mxu0 0.0
        %297 = vmatprep.subr.mxu0 0.0
        %298 = vmatpush1.msra.mxu0 0.0
        %299 = vmatprep.subr.mxu0 0.0
        %300 = vmatpush1.msra.mxu0 0.0
        %301 = vmatprep.subr.mxu0 0.0
        %302 = vmatpush1.msra.mxu0 0.0
        %303 = vmatprep.subr.mxu0 0.0
        %304 = vmatpush1.msra.mxu0 0.0
        %305 = vmatprep.subr.mxu0 0.0
        %306 = vmatpush1.msra.mxu0 0.0
        %307 = vmatprep.subr.mxu0 0.0
        %308 = vmatpush1.msra.mxu0 0.0
        %309 = vmatprep.subr.mxu0 0.0
        %310 = vmatpush1.msra.mxu0 0.0
        %311 = vmatprep.subr.mxu0 0.0
        %312 = vmatpush1.msra.mxu0 0.0
        %313 = vmatprep.subr.mxu0 0.0
        %314 = vmatpush1.msra.mxu0 0.0
        %315 = vmatprep.subr.mxu0 0.0
        %316 = vmatpush1.msra.mxu0 0.0
        %317 = vmatprep.subr.mxu0 0.0
        %318 = vmatpush1.msra.mxu0 0.0
        %319 = vmatprep.subr.mxu0 0.0
        %320 = vmatpush1.msra.mxu0 0.0
        %321 = vmatprep.subr.mxu0 0.0
        %322 = vmatpush1.msra.mxu0 0.0
        %323 = vmatprep.subr.mxu0 0.0
        %324 = vmatpush1.msra.mxu0 0.0
        %325 = vmatprep.subr.mxu0 0.0
        %326 = vmatpush1.msra.mxu0 0.0
        %327 = vmatprep.subr.mxu0 0.0
        %328 = vmatpush1.msra.mxu0 0.0
        %329 = vmatprep.subr.mxu0 0.0
        %330 = vmatpush1.msra.mxu0 0.0
        %331 = vmatprep.subr.mxu0 0.0
        %332 = vmatpush1.msra.mxu0 0.0
        %333 = vmatprep.subr.mxu0 0.0
        %334 = vmatpush1.msra.mxu0 0.0
        %335 = vmatprep.subr.mxu0 0.0
        %336 = vmatpush1.msra.mxu0 0.0
        %337 = vmatprep.mubr.f32.mxu0 0.0
        %338 = vmatmul.mubr.f32.gmra.mrb[0].mxu0 %v266
        %v339 = vpop.f32.mrb[0].mxu0
        %v340 = vadd.f32 %v260, %v339
        %v341 = vpop.f32.mrb[0].mxu0
        %v342 = vadd.f32 %v260, %v341
        %343 = vdwg.mxu0
        %v344 = vmax.f32 %v340, 0.0
        %v345 = vmax.f32 %v342, 0.0
        %v346 = vld [vmem:[%s3] sm:$0xff]
        %v347 = vld [vmem:[%s4] sm:$0xff]
        %349 = vset.pattern.permute.xlu0 0
        %350 = vperm.xlu0 %349, %v347
        %v351 = vpop.permute.xlu0 %350
        %vm353 = vcmask 64512
        %v355 = vsel %vm353, %v346, 0
        %357 = vmatprep.subr.mxu0 %v345
        %358 = vmatpush1.msra.mxu0 %v344
        %359 = vmatprep.subr.mxu0 0.0
        %360 = vmatpush1.msra.mxu0 0.0
        %361 = vmatprep.subr.mxu0 0.0
        %362 = vmatpush1.msra.mxu0 0.0
        %363 = vmatprep.subr.mxu0 0.0
        %364 = vmatpush1.msra.mxu0 0.0
        %365 = vmatprep.subr.mxu0 0.0
        %366 = vmatpush1.msra.mxu0 0.0
        %367 = vmatprep.subr.mxu0 0.0
        %368 = vmatpush1.msra.mxu0 0.0
        %369 = vmatprep.subr.mxu0 0.0
        %370 = vmatpush1.msra.mxu0 0.0
        %371 = vmatprep.subr.mxu0 0.0
        %372 = vmatpush1.msra.mxu0 0.0
        %373 = vmatprep.subr.mxu0 0.0
        %374 = vmatpush1.msra.mxu0 0.0
        %375 = vmatprep.subr.mxu0 0.0
        %376 = vmatpush1.msra.mxu0 0.0
        %377 = vmatprep.subr.mxu0 0.0
        %378 = vmatpush1.msra.mxu0 0.0
        %379 = vmatprep.subr.mxu0 0.0
        %380 = vmatpush1.msra.mxu0 0.0
        %381 = vmatprep.subr.mxu0 0.0
        %382 = vmatpush1.msra.mxu0 0.0
        %383 = vmatprep.subr.mxu0 0.0
        %384 = vmatpush1.msra.mxu0 0.0
        %385 = vmatprep.subr.mxu0 0.0
        %386 = vmatpush1.msra.mxu0 0.0
        %387 = vmatprep.subr.mxu0 0.0
        %388 = vmatpush1.msra.mxu0 0.0
        %389 = vmatprep.subr.mxu0 0.0
        %390 = vmatpush1.msra.mxu0 0.0
        %391 = vmatprep.subr.mxu0 0.0
        %392 = vmatpush1.msra.mxu0 0.0
        %393 = vmatprep.subr.mxu0 0.0
        %394 = vmatpush1.msra.mxu0 0.0
        %395 = vmatprep.subr.mxu0 0.0
        %396 = vmatpush1.msra.mxu0 0.0
        %397 = vmatprep.subr.mxu0 0.0
        %398 = vmatpush1.msra.mxu0 0.0
        %399 = vmatprep.subr.mxu0 0.0
        %400 = vmatpush1.msra.mxu0 0.0
        %401 = vmatprep.subr.mxu0 0.0
        %402 = vmatpush1.msra.mxu0 0.0
        %403 = vmatprep.subr.mxu0 0.0
        %404 = vmatpush1.msra.mxu0 0.0
        %405 = vmatprep.subr.mxu0 0.0
        %406 = vmatpush1.msra.mxu0 0.0
        %407 = vmatprep.subr.mxu0 0.0
        %408 = vmatpush1.msra.mxu0 0.0
        %409 = vmatprep.subr.mxu0 0.0
        %410 = vmatpush1.msra.mxu0 0.0
        %411 = vmatprep.subr.mxu0 0.0
        %412 = vmatpush1.msra.mxu0 0.0
        %413 = vmatprep.subr.mxu0 0.0
        %414 = vmatpush1.msra.mxu0 0.0
        %415 = vmatprep.subr.mxu0 0.0
        %416 = vmatpush1.msra.mxu0 0.0
        %417 = vmatprep.subr.mxu0 0.0
        %418 = vmatpush1.msra.mxu0 0.0
        %419 = vmatprep.subr.mxu0 0.0
        %420 = vmatpush1.msra.mxu0 0.0
        %421 = vmatprep.mubr.f32.mxu0 0.0
        %422 = vmatmul.mubr.f32.gmra.mrb[0].mxu0 %v355
        %v423 = vpop.f32.mrb[0].mxu0
        %v424 = vadd.f32 %v351, %v423
        %v425 = vpop.f32.mrb[0].mxu0
        %v426 = vadd.f32 %v351, %v425
        %427 = vdwg.mxu0
        %v428 = vmax.f32 %v424, 0.0
        %v429 = vmax.f32 %v426, 0.0
        %430 = vst [vmem:[%s242] sm:$0xff] %v428
        %431 = vst [vmem:[%s242 + $0x8] sm:$0xff] %v429
        %s432 = sand.u32 %s153, 1
        %s433 = scalar_lea.sflag [#allocation3], %s432
        %s434 = sand.u32 %s153, 1
        %s435 = smul.addr %s434, 16
        %s436 = scalar_lea.vmem [#allocation2], %s435
        // Predicated region
        $region41: #{tpu_custom_call.1} parent=39 // pred_check
          %p437 = pneg %p163
        $region42: #{tpu_custom_call.1} parent=39 // pred_check_branch
          %439 = sbr.rel (%p437) target = $region44
        $region43: #{tpu_custom_call.1} parent=39 // pred_region
          %s440 = smul.u32 2, %s24
          %s442 = ssub.s32 256, 256
          %443 = vsyncadd %s433, %s442
          %s444 = smul.addr %s23, 2
          %s445 = sadd.s32 %s440, %s444
          %s446 = smul.addr %s445, 128
          %s447 = scalar_lea.hbm %s5, %s446
          %s449 = sshll.u32 %s436, 4
          %s450 = int_to_ptr.vmem [resolvable:$true] %s449
          %452 = dma.vmem_to_hbm [thread:$0]  %s450, 256, %s447, %s433
        $region44: #{tpu_custom_call.1} parent=39 // pred_fallthru
          _
      $region40: #{tpu_custom_call.1} parent=5 // pred_fallthru
        _
      %p453 = scmp.le.s32.totalorder 2, %s14
      // Predicated region
      $region45: #{tpu_custom_call.1} parent=5 // pred_check
        %p454 = pneg %p453
      $region46: #{tpu_custom_call.1} parent=5 // pred_check_branch
        %456 = sbr.rel (%p454) target = $region48
      $region47: #{tpu_custom_call.1} parent=5 // pred_region
        %s457 = ssub.s32 %s14, 2
        // Predicated region
        $region49: #{tpu_custom_call.1} parent=47 // pred_check
          %p458 = pneg %p169
        $region50: #{tpu_custom_call.1} parent=47 // pred_check_branch
          %460 = sbr.rel (%p458) target = $region52
        $region51: #{tpu_custom_call.1} parent=47 // pred_region
          %s461 = sand.u32 %s154, 1
          %s462 = scalar_lea.sflag [#allocation3], %s461
          %s463 = sand.u32 %s154, 1
          %s464 = smul.addr %s463, 16
          %s465 = scalar_lea.vmem [#allocation2], %s464
          %466 = dma.done %s462, 256
        $region52: #{tpu_custom_call.1} parent=47 // pred_fallthru
          _
      $region48: #{tpu_custom_call.1} parent=5 // pred_fallthru
        _
    $region6: #{tpu_custom_call.1} parent=1 // loop_footer
      %s18 = sadd.s32 1, %s14
    $region7: #{tpu_custom_call.1} parent=1 // loop_footer_branch
      %13 = sbr.rel target = $region3
    $region8: #{tpu_custom_call.1} parent=1 // loop_exit
      _
    %467 = vsyncpa [#allocation3], 1
    %s468 = scalar_lea.sflag [#allocation3], 1
    %469 = vsyncpa %s468, 1

</llo_original>
